<compile_context>
chip_gen: v7x
topology: tpu7x:2x2x1
jax: 0.10.0
libtpu: 0.0.40
codegen_flags: <defaults>
</compile_context>

<pallas_src>
import jax
import jax.numpy as jnp
from jax.experimental import pallas as pl
from jax.experimental.pallas import tpu as pltpu

_PAIRS = 128               # (f0, f1) pairs per lane-dense row == output lane width
_ROW_ELEMS = 2 * _PAIRS    # 256 f32 per input-slab row


def _utility_kernel(x_ref, w_ref, o_ref):
    # x_ref: (tile_m, 256)   w_ref: (256, 128) VMEM-resident   o_ref: (tile_m, 128)
    o_ref[...] = jnp.dot(
        x_ref[...], w_ref[...], preferred_element_type=jnp.float32
    )


def _pair_weight_matrix(weights):
    """Constant (256, 128) matrix with W[2k, k] = w0, W[2k+1, k] = w1."""
    w = jnp.asarray(weights, jnp.float32).reshape(2)
    eye = jnp.eye(_PAIRS, dtype=jnp.float32)                      # (128, 128)
    return (eye[:, None, :] * w[None, :, None]).reshape(_ROW_ELEMS, _PAIRS)


def utility_layer(x, weights, *, tile_m=2048):
    """Pallas TPU UtilityLayer.forward: dot of trailing dim 2 with `weights`."""
    x = jnp.asarray(x, jnp.float32)
    assert x.shape[-1] == 2, "UtilityLayer expects a trailing dim of 2"
    w = jnp.asarray(weights, jnp.float32)
    assert w.shape == (2,), "UtilityLayer expects exactly 2 weights"
    assert tile_m % 8 == 0, "tile_m must be a multiple of 8 (sublane constraint)"

    lead_shape = x.shape[:-1]
    n = 1
    for d in lead_shape:
        n *= d
    x2 = x.reshape(n, 2)

    # Lane-dense input slab; only the sub-128-row remainder is ever padded.
    n_pad = pl.cdiv(n, _PAIRS) * _PAIRS
    if n_pad != n:
        x2 = jnp.pad(x2, ((0, n_pad - n), (0, 0)))    # <= 127 rows (<= ~1 KiB)
    m = n_pad // _PAIRS
    x_slab = x2.reshape(m, _ROW_ELEMS)                # contiguous -> free reshape

    w_mat = _pair_weight_matrix(w)                    # (256, 128) resident weights

    # One full-array block when small; otherwise MiB tiles + ragged last block.
    tile = m if m <= tile_m else tile_m
    grid_m = pl.cdiv(m, tile)

    out_slab = pl.pallas_call(
        _utility_kernel,
        out_shape=jax.ShapeDtypeStruct((m, _PAIRS), jnp.float32),
        grid_spec=pltpu.PrefetchScalarGridSpec(
            num_scalar_prefetch=0,
            grid=(grid_m,),
            in_specs=[
                pl.BlockSpec((tile, _ROW_ELEMS), lambda i: (i, 0)),    # x tiles
                pl.BlockSpec((_ROW_ELEMS, _PAIRS), lambda i: (0, 0)),  # resident W
            ],
            out_specs=pl.BlockSpec((tile, _PAIRS), lambda i: (i, 0)),
        ),
        compiler_params=pltpu.CompilerParams(
            dimension_semantics=("parallel",),   # lets v7x shard rows over 2 TCs
        ),
    )(x_slab, w_mat)

    out = out_slab.reshape(n_pad)[:n]
    return out.reshape(lead_shape)


if __name__ == "__main__":
    # Deterministic parameter init (matches nn.Parameter(torch.tensor([-1.0, -2.0]))).
    weights = jnp.array([-1.0, -2.0], dtype=jnp.float32)

    key = jax.random.PRNGKey(0)

    # Main small example: batch=2, seq=512, feature=2 (128-aligned, no pad copy).
    x = jax.random.normal(key, (2, 512, 2), dtype=jnp.float32)
    utility = utility_layer(x, weights)
    jax.block_until_ready(utility)
    ref = x[..., 0] * weights[0] + x[..., 1] * weights[1]   # exact f32 reference
    assert utility.shape == ref.shape == (2, 512)
    assert jnp.allclose(utility, ref, atol=1e-4, rtol=1e-4), "mismatch vs reference"

    # Unaligned shape: exercises the small (<128 row) pad path.
    x_odd = jax.random.normal(jax.random.PRNGKey(1), (3, 7, 2), dtype=jnp.float32)
    u_odd = utility_layer(x_odd, weights)
    jax.block_until_ready(u_odd)
    ref_odd = x_odd[..., 0] * weights[0] + x_odd[..., 1] * weights[1]
    assert jnp.allclose(u_odd, ref_odd, atol=1e-4, rtol=1e-4), "mismatch (pad path)"

    # Multi-step grid with a ragged last block (M=20 slab rows, tile_m=8 -> grid=3).
    x_big = jax.random.normal(jax.random.PRNGKey(2), (20 * 128, 2), dtype=jnp.float32)
    u_big = utility_layer(x_big, weights, tile_m=8)
    jax.block_until_ready(u_big)
    ref_big = x_big[..., 0] * weights[0] + x_big[..., 1] * weights[1]
    assert jnp.allclose(u_big, ref_big, atol=1e-4, rtol=1e-4), "mismatch (ragged grid)"

    print("KERNEL_OK")
</pallas_src>

<mosaic_0001>
module attributes {stable_mosaic.version = 11 : i64} {
  func.func @_utility_kernel(%arg0: i32, %arg1: memref<8x256xf32, #tpu.memory_space<vmem>>, %arg2: memref<256x128xf32, #tpu.memory_space<vmem>>, %arg3: memref<8x128xf32, #tpu.memory_space<vmem>>) attributes {dimension_semantics = [#tpu.dimension_semantics<parallel>], iteration_bounds = array<i64: 1>, scalar_prefetch = 0 : i64, scratch_operands = 0 : i64, tpu.core_type = #tpu.core_type<tc>, window_params = [{transform_indices = @transform_0, window_bounds = array<i64: 8, 256>}, {pipeline_mode = #tpu.pipeline_mode<synchronous>, transform_indices = @transform_1, window_bounds = array<i64: 256, 128>}, {transform_indices = @transform_2, window_bounds = array<i64: 8, 128>}]} {
    %c0 = arith.constant 0 : index
    %c0_0 = arith.constant 0 : index
    %0 = vector.load %arg1[%c0, %c0_0] : memref<8x256xf32, #tpu.memory_space<vmem>>, vector<8x256xf32>
    %c0_1 = arith.constant 0 : index
    %c0_2 = arith.constant 0 : index
    %1 = vector.load %arg2[%c0_1, %c0_2] : memref<256x128xf32, #tpu.memory_space<vmem>>, vector<256x128xf32>
    %cst = arith.constant dense<0.000000e+00> : vector<8x128xf32>
    %2 = tpu.matmul %0, %1, %cst {dimension_numbers = #tpu.dot_dimension_numbers<[1], [0], [0], [1], [0, 0, 1, 1], [], []>} : vector<8x256xf32>, vector<256x128xf32>, vector<8x128xf32> -> vector<8x128xf32>
    %c0_3 = arith.constant 0 : index
    %c0_4 = arith.constant 0 : index
    %3 = vector.load %arg3[%c0_3, %c0_4] : memref<8x128xf32, #tpu.memory_space<vmem>>, vector<8x128xf32>
    tpu.vector_store %arg3[%c0_3, %c0_4], %2 {strides = array<i32>} : memref<8x128xf32, #tpu.memory_space<vmem>>, vector<8x128xf32>,
    return
  }
  func.func @transform_0(%arg0: i32) -> (i32, i32) {
    %c0_i32 = arith.constant 0 : i32
    %c0_i32_0 = arith.constant 0 : i32
    return %arg0, %c0_i32 : i32, i32
  }
  func.func @transform_1(%arg0: i32) -> (i32, i32) {
    %c0_i32 = arith.constant 0 : i32
    %c0_i32_0 = arith.constant 0 : i32
    %c0_i32_1 = arith.constant 0 : i32
    return %c0_i32, %c0_i32_0 : i32, i32
  }
  func.func @transform_2(%arg0: i32) -> (i32, i32) {
    %c0_i32 = arith.constant 0 : i32
    %c0_i32_0 = arith.constant 0 : i32
    return %arg0, %c0_i32 : i32, i32
  }
}

</mosaic_0001>

<llo_original>
// kernel: tpu_custom_call.1
$region0: #{tpu_custom_call.1}
  #allocation0 [shape = 'u32[]', space=smem, size = 0x4, offset = 0x4, fixed_abs, tag = 'smem constant byte address 0x4 - core index']
  #allocation1 [shape = 'u32[144,128]{1,0:T(1,128)}', space=vmem, size = 0x12000, scoped, tag = 'internal scratch']
  %s0 = inlined_call_operand.hbm [shape: f32[8,256], index: 0, kind: input, shape index: {}]
  %s1 = inlined_call_operand.hbm [shape: f32[256,128], index: 1, kind: input, shape index: {}]
  %s2 = inlined_call_operand.hbm [shape: f32[8,128], index: 2, kind: output, shape index: {}]
  %s3 = sld [smem:[#allocation0]]
  $region26: #{tpu_custom_call.1} parent=0
    _
  %s5 = ssub.s32 1, %s3
  %s6 = scalar_select 0, %s5, %s3
  $region1: #{tpu_custom_call.1} parent=0
    #allocation2 [shape = 'u8[8192]{0}', space=vmem, size = 0x2000, scoped, tag = 'input window, operand 0, single buffered']
    #allocation3 [shape = 's32[1]{0}', space=sflag, size = 0x4, scoped, tag = 'scoped memory for tpu_custom_call.1']
    #allocation4 [shape = 's32[1]{0}', space=sflag, size = 0x4, scoped, tag = 'scoped memory for tpu_custom_call.1']
    #allocation5 [shape = 'u8[131072]{0}', space=vmem, size = 0x20000, scoped, tag = 'input window, operand 1, single buffered']
    #allocation6 [shape = 's32[1]{0}', space=sflag, size = 0x4, scoped, tag = 'scoped memory for tpu_custom_call.1']
    #allocation7 [shape = 'u8[4096]{0}', space=vmem, size = 0x1000, scoped, tag = 'output window, operand 0, single buffered']
    %7 = vsyncpa [#allocation3], 0
    %8 = vsyncpa [#allocation6], 0
    %9 = vsyncpa [#allocation4], 0
    // Predicated region
    $region2: #{tpu_custom_call.1} parent=1 // pred_check
      _
    $region3: #{tpu_custom_call.1} parent=1 // pred_check_branch
      %11 = sbr.rel (0) target = $region5
    $region4: #{tpu_custom_call.1} parent=1 // pred_region
      %s13 = ssub.s32 256, 256
      %14 = vsyncadd [#allocation3], %s13
      %s16 = sshll.u32 [#allocation2], 4
      %s17 = int_to_ptr.vmem [resolvable:$true] %s16
      %19 = dma.hbm_to_vmem [thread:$0]  %s0, 256, %s17, [#allocation3]
    $region5: #{tpu_custom_call.1} parent=1 // pred_fallthru
      _
    // Predicated region
    $region6: #{tpu_custom_call.1} parent=1 // pred_check
      _
    $region7: #{tpu_custom_call.1} parent=1 // pred_check_branch
      %21 = sbr.rel (0) target = $region9
    $region8: #{tpu_custom_call.1} parent=1 // pred_region
      %s23 = ssub.s32 4096, 4096
      %24 = vsyncadd [#allocation6], %s23
      %s25 = sshll.u32 [#allocation5], 4
      %s26 = int_to_ptr.vmem [resolvable:$true] %s25
      %31 = dma.hbm_to_vmem [thread:$0]  %s1, 4096, %s26, [#allocation6], 128, 128, 8
    $region9: #{tpu_custom_call.1} parent=1 // pred_fallthru
      _
    // Predicated region
    $region10: #{tpu_custom_call.1} parent=1 // pred_check
      _
    $region11: #{tpu_custom_call.1} parent=1 // pred_check_branch
      %33 = sbr.rel (0) target = $region13
    $region12: #{tpu_custom_call.1} parent=1 // pred_region
      %34 = dma.done [#allocation3], 256
    $region13: #{tpu_custom_call.1} parent=1 // pred_fallthru
      _
    // Predicated region
    $region14: #{tpu_custom_call.1} parent=1 // pred_check
      _
    $region15: #{tpu_custom_call.1} parent=1 // pred_check_branch
      %36 = sbr.rel (0) target = $region17
    $region16: #{tpu_custom_call.1} parent=1 // pred_region
      %37 = dma.done [#allocation6], 4096
    $region17: #{tpu_custom_call.1} parent=1 // pred_fallthru
      _
    %v38 = vld [vmem:[#allocation2] sm:$0xff]
    %v39 = vld [vmem:[#allocation2 + $0x8] sm:$0xff]
    %v40 = vld [vmem:[#allocation5] sm:$0xff]
    %v41 = vld [vmem:[#allocation5 + $0x8] sm:$0xff]
    %v42 = vld [vmem:[#allocation5 + $0x10] sm:$0xff]
    %v43 = vld [vmem:[#allocation5 + $0x18] sm:$0xff]
    %v44 = vld [vmem:[#allocation5 + $0x20] sm:$0xff]
    %v45 = vld [vmem:[#allocation5 + $0x28] sm:$0xff]
    %v46 = vld [vmem:[#allocation5 + $0x30] sm:$0xff]
    %v47 = vld [vmem:[#allocation5 + $0x38] sm:$0xff]
    %v48 = vld [vmem:[#allocation5 + $0x40] sm:$0xff]
    %v49 = vld [vmem:[#allocation5 + $0x48] sm:$0xff]
    %v50 = vld [vmem:[#allocation5 + $0x50] sm:$0xff]
    %v51 = vld [vmem:[#allocation5 + $0x58] sm:$0xff]
    %v52 = vld [vmem:[#allocation5 + $0x60] sm:$0xff]
    %v53 = vld [vmem:[#allocation5 + $0x68] sm:$0xff]
    %v54 = vld [vmem:[#allocation5 + $0x70] sm:$0xff]
    %v55 = vld [vmem:[#allocation5 + $0x78] sm:$0xff]
    %v56 = vld [vmem:[#allocation5 + $0x80] sm:$0xff]
    %v57 = vld [vmem:[#allocation5 + $0x88] sm:$0xff]
    %v58 = vld [vmem:[#allocation5 + $0x90] sm:$0xff]
    %v59 = vld [vmem:[#allocation5 + $0x98] sm:$0xff]
    %v60 = vld [vmem:[#allocation5 + $0xa0] sm:$0xff]
    %v61 = vld [vmem:[#allocation5 + $0xa8] sm:$0xff]
    %v62 = vld [vmem:[#allocation5 + $0xb0] sm:$0xff]
    %v63 = vld [vmem:[#allocation5 + $0xb8] sm:$0xff]
    %v64 = vld [vmem:[#allocation5 + $0xc0] sm:$0xff]
    %v65 = vld [vmem:[#allocation5 + $0xc8] sm:$0xff]
    %v66 = vld [vmem:[#allocation5 + $0xd0] sm:$0xff]
    %v67 = vld [vmem:[#allocation5 + $0xd8] sm:$0xff]
    %v68 = vld [vmem:[#allocation5 + $0xe0] sm:$0xff]
    %v69 = vld [vmem:[#allocation5 + $0xe8] sm:$0xff]
    %v70 = vld [vmem:[#allocation5 + $0xf0] sm:$0xff]
    %v71 = vld [vmem:[#allocation5 + $0xf8] sm:$0xff]
    %72 = vmatprep.subr.mxu0 0.0
    %73 = vmatpush1.msra.mxu0 %v40
    %74 = vmatprep.subr.mxu0 0.0
    %75 = vmatpush1.msra.mxu0 %v41
    %76 = vmatprep.subr.mxu0 0.0
    %77 = vmatpush1.msra.mxu0 %v42
    %78 = vmatprep.subr.mxu0 0.0
    %79 = vmatpush1.msra.mxu0 %v43
    %80 = vmatprep.subr.mxu0 0.0
    %81 = vmatpush1.msra.mxu0 %v44
    %82 = vmatprep.subr.mxu0 0.0
    %83 = vmatpush1.msra.mxu0 %v45
    %84 = vmatprep.subr.mxu0 0.0
    %85 = vmatpush1.msra.mxu0 %v46
    %86 = vmatprep.subr.mxu0 0.0
    %87 = vmatpush1.msra.mxu0 %v47
    %88 = vmatprep.subr.mxu0 0.0
    %89 = vmatpush1.msra.mxu0 %v48
    %90 = vmatprep.subr.mxu0 0.0
    %91 = vmatpush1.msra.mxu0 %v49
    %92 = vmatprep.subr.mxu0 0.0
    %93 = vmatpush1.msra.mxu0 %v50
    %94 = vmatprep.subr.mxu0 0.0
    %95 = vmatpush1.msra.mxu0 %v51
    %96 = vmatprep.subr.mxu0 0.0
    %97 = vmatpush1.msra.mxu0 %v52
    %98 = vmatprep.subr.mxu0 0.0
    %99 = vmatpush1.msra.mxu0 %v53
    %100 = vmatprep.subr.mxu0 0.0
    %101 = vmatpush1.msra.mxu0 %v54
    %102 = vmatprep.subr.mxu0 0.0
    %103 = vmatpush1.msra.mxu0 %v55
    %104 = vmatprep.subr.mxu0 0.0
    %105 = vmatpush1.msra.mxu0 %v56
    %106 = vmatprep.subr.mxu0 0.0
    %107 = vmatpush1.msra.mxu0 %v57
    %108 = vmatprep.subr.mxu0 0.0
    %109 = vmatpush1.msra.mxu0 %v58
    %110 = vmatprep.subr.mxu0 0.0
    %111 = vmatpush1.msra.mxu0 %v59
    %112 = vmatprep.subr.mxu0 0.0
    %113 = vmatpush1.msra.mxu0 %v60
    %114 = vmatprep.subr.mxu0 0.0
    %115 = vmatpush1.msra.mxu0 %v61
    %116 = vmatprep.subr.mxu0 0.0
    %117 = vmatpush1.msra.mxu0 %v62
    %118 = vmatprep.subr.mxu0 0.0
    %119 = vmatpush1.msra.mxu0 %v63
    %120 = vmatprep.subr.mxu0 0.0
    %121 = vmatpush1.msra.mxu0 %v64
    %122 = vmatprep.subr.mxu0 0.0
    %123 = vmatpush1.msra.mxu0 %v65
    %124 = vmatprep.subr.mxu0 0.0
    %125 = vmatpush1.msra.mxu0 %v66
    %126 = vmatprep.subr.mxu0 0.0
    %127 = vmatpush1.msra.mxu0 %v67
    %128 = vmatprep.subr.mxu0 0.0
    %129 = vmatpush1.msra.mxu0 %v68
    %130 = vmatprep.subr.mxu0 0.0
    %131 = vmatpush1.msra.mxu0 %v69
    %132 = vmatprep.subr.mxu0 0.0
    %133 = vmatpush1.msra.mxu0 %v70
    %134 = vmatprep.subr.mxu0 0.0
    %135 = vmatpush1.msra.mxu0 %v71
    %136 = vmatprep.mubr.f32.mxu0 %v39
    %137 = vmatmul.mubr.f32.gmra.mrb[0].mxu0 %v38
    %v138 = vpop.f32.mrb[0].mxu0
    %v139 = vadd.f32 0.0, %v138
    %v140 = vpop.f32.mrb[0].mxu0
    %141 = vdwg.mxu0
    %142 = vst [vmem:[#allocation7] sm:$0xff] %v139
    // Predicated region
    $region18: #{tpu_custom_call.1} parent=1 // pred_check
      _
    $region19: #{tpu_custom_call.1} parent=1 // pred_check_branch
      %144 = sbr.rel (0) target = $region21
    $region20: #{tpu_custom_call.1} parent=1 // pred_region
      %s146 = ssub.s32 128, 128
      %147 = vsyncadd [#allocation4], %s146
      %s149 = sshll.u32 [#allocation7], 4
      %s150 = int_to_ptr.vmem [resolvable:$true] %s149
      %152 = dma.vmem_to_hbm [thread:$0]  %s150, 128, %s2, [#allocation4]
    $region21: #{tpu_custom_call.1} parent=1 // pred_fallthru
      _
    // Predicated region
    $region22: #{tpu_custom_call.1} parent=1 // pred_check
      _
    $region23: #{tpu_custom_call.1} parent=1 // pred_check_branch
      %154 = sbr.rel (0) target = $region25
    $region24: #{tpu_custom_call.1} parent=1 // pred_region
      %155 = dma.done [#allocation4], 128
    $region25: #{tpu_custom_call.1} parent=1 // pred_fallthru
      _
    %156 = vsyncpa [#allocation3], 1
    %157 = vsyncpa [#allocation6], 1
    %158 = vsyncpa [#allocation4], 1

</llo_original>
